<compile_context>
chip_gen: v5e
topology: v5e:2x2
jax: 0.10.0
libtpu: 0.0.40
codegen_flags: <defaults>
</compile_context>

<pallas_src>
import functools

import jax
import jax.numpy as jnp
from jax import lax
from jax.experimental import pallas as pl
from jax.experimental.pallas import tpu as pltpu


_LANE = 128            # edge-score tile width (one lane-dense output row per block)


# ------------------------------ fused kernel ------------------------------- #

def _fused_rgcn_kernel(a_cat_ref, x_ref,
                       w1_ref, w2_ref, w3_ref,
                       b1_ref, b2_ref, b3_ref,
                       ssel_ref, dsel_ref,
                       scores_ref):
    """Whole Model.forward for one 128-lane block of predictor edges.

    a_cat_ref : (N, R*N)        bf16  [A_1 | ... | A_R] normalized dense adjacency
    x_ref     : (N, F_in)       bf16  input node features
    w*_ref    : (R, Fin, Fout)  bf16  per-relation GraphConv weights
    b*_ref    : (1, Fout)       f32   bias summed over relations (hoisted)
    ssel/dsel : (N, TE)         bf16  one-hot columns selecting src / dst node of
                                      this block's edges (pos first, then neg)
    scores_ref: (1, TE)         f32   lane-dense u_dot_v scores for this block
    """
    n_rel = w1_ref.shape[0]
    a_cat = a_cat_ref[...]                                   # (N, R*N) bf16
    h = x_ref[...]                                           # (N, Fin) bf16

    for w_ref, b_ref, relu in ((w1_ref, b1_ref, True),
                               (w2_ref, b2_ref, True),
                               (w3_ref, b3_ref, False)):
        # R small projections (sublane-stacked) + ONE wide aggregation matmul:
        #   sum_r A_r (h W_r) = [A_1 | ... | A_R] @ vstack([h W_1; ...; h W_R])
        hw_stack = jnp.concatenate(
            [jnp.dot(h, w_ref[r], preferred_element_type=jnp.float32)
             for r in range(n_rel)],
            axis=0).astype(jnp.bfloat16)                     # (R*N, Fout), 1 cast/layer
        acc = jnp.dot(a_cat, hw_stack,
                      preferred_element_type=jnp.float32)    # (N, Fout) f32
        acc = acc + b_ref[...]                               # hoisted sum_r b_r
        if relu:
            acc = jnp.maximum(acc, 0.0)
        h = acc.astype(jnp.bfloat16)                         # bf16 into next MXU pass

    # HeteroDotProductPredictor (u_dot_v), pos+neg edges of this block in one
    # transposed matmul: concat src||dst selectors along lanes -> (N, 2*TE),
    # one dot_general -> (Fout, 2*TE), split halves, multiply + sublane-reduce.
    te = ssel_ref.shape[1]
    sel_cat = jnp.concatenate([ssel_ref[...], dsel_ref[...]], axis=1)    # (N, 2*TE)
    proj = lax.dot_general(h, sel_cat, (((0,), (0,)), ((), ())),
                           preferred_element_type=jnp.float32)           # (Fout, 2*TE)
    scores_ref[...] = jnp.sum(proj[:, :te] * proj[:, te:],
                              axis=0, keepdims=True)                     # (1, TE)


# --------------------------- one-time preparation --------------------------- #

def prepare_graph(a_norm, src_sel, dst_sel):
    """Per-graph constants, computed ONCE (not per forward call)."""
    bf = jnp.bfloat16
    a_cat = jnp.concatenate(list(a_norm), axis=1).astype(bf)     # (N, R*N)
    return {"a_cat": a_cat,
            "ssel": src_sel.astype(bf),
            "dsel": dst_sel.astype(bf)}


def prepare_params(params):
    """Parameter prep (bf16 weights, relation-summed f32 biases), done ONCE."""
    bf = jnp.bfloat16
    return {
        "w1": params["w1"].astype(bf),
        "w2": params["w2"].astype(bf),
        "w3": params["w3"].astype(bf),
        # aggregate='sum' over relations (single dst node type) => biases collapse.
        "b1": jnp.sum(params["b1"], axis=0),
        "b2": jnp.sum(params["b2"], axis=0),
        "b3": jnp.sum(params["b3"], axis=0),
    }


# ------------------------------- glue / model ------------------------------ #

def model_forward(prep, graph, x, *, n_pos, n_neg):
    """Runs the fused kernel; returns (pos_score, neg_score), each (E, 1) f32."""
    a_cat, ssel, dsel = graph["a_cat"], graph["ssel"], graph["dsel"]
    n_nodes = a_cat.shape[0]
    e_pad = ssel.shape[1]
    assert e_pad % _LANE == 0
    n_blocks = e_pad // _LANE                       # "parallel" edge-score blocks
    x_bf = x.astype(jnp.bfloat16)

    operands = (a_cat, x_bf, prep["w1"], prep["w2"], prep["w3"],
                prep["b1"], prep["b2"], prep["b3"], ssel, dsel)

    def full_spec(shape):
        nd = len(shape)
        return pl.BlockSpec(shape, lambda i, _nd=nd: (0,) * _nd)

    edge_spec = pl.BlockSpec((n_nodes, _LANE), lambda i: (0, i))
    in_specs = [full_spec(op.shape) for op in operands[:8]] + [edge_spec, edge_spec]

    # Cost estimate (advisory, helps XLA schedule around the custom call).
    flops = 0
    for w in (prep["w1"], prep["w2"], prep["w3"]):
        r, f_in, f_out = w.shape
        flops += 2 * r * n_nodes * f_in * f_out            # projections
        flops += 2 * n_nodes * (r * n_nodes) * f_out       # aggregation
    out_f = prep["w3"].shape[2]
    flops += 2 * n_nodes * out_f * (2 * _LANE) + 2 * out_f * _LANE   # predictor
    flops *= n_blocks
    bytes_accessed = sum(int(op.size) * op.dtype.itemsize for op in operands)
    bytes_accessed += e_pad * 4

    # VMEM footprint of one grid step (resident constants + one edge block),
    # with headroom; raises v5e's 16 MiB scoped default.
    blk_bytes = sum(int(op.size) * op.dtype.itemsize for op in operands[:8])
    blk_bytes += 2 * n_nodes * _LANE * 2 + _LANE * 4
    vmem_limit = int(min(64 * 2**20, max(32 * 2**20, 4 * blk_bytes)))

    scores = pl.pallas_call(
        _fused_rgcn_kernel,
        out_shape=jax.ShapeDtypeStruct((1, e_pad), jnp.float32),
        grid=(n_blocks,),
        in_specs=in_specs,
        out_specs=pl.BlockSpec((1, _LANE), lambda i: (0, i)),
        compiler_params=pltpu.CompilerParams(
            dimension_semantics=("parallel",),
            vmem_limit_bytes=vmem_limit),
        cost_estimate=pl.CostEstimate(
            flops=int(flops), transcendentals=0, bytes_accessed=int(bytes_accessed)),
    )(*operands)
    # TODO(synk): for large graphs, tile a_cat / h over dst-row blocks via
    # BlockSpec and split the RGCN body into its own pallas_call so h is not
    # recomputed per edge block; replace one-hot selector matmuls with a
    # scalar-prefetch (SMEM edge-index) gather.

    pos_score = scores[0, :n_pos][:, None]
    neg_score = scores[0, n_pos:n_pos + n_neg][:, None]
    return pos_score, neg_score


# ----------------------------- graph construction --------------------------- #

def build_norm_adjacency(src, dst, n_nodes):
    """Dense DGL GraphConv(norm='both') propagation matrix for one relation."""
    a = jnp.zeros((n_nodes, n_nodes), jnp.float32).at[dst, src].add(1.0)   # A[v,u]
    out_deg = jnp.maximum(a.sum(axis=0), 1.0)                              # src out-degree
    in_deg = jnp.maximum(a.sum(axis=1), 1.0)                               # dst in-degree
    return a * (in_deg[:, None] ** -0.5) * (out_deg[None, :] ** -0.5)


def build_edge_selectors(src_idx, dst_idx, n_nodes, lane=_LANE):
    """One-hot COLUMN selectors (N, E_pad) for the merged pos+neg predictor."""
    e = src_idx.shape[0]
    e_pad = ((e + lane - 1) // lane) * lane
    cols = jnp.arange(e)
    src_sel = jnp.zeros((n_nodes, e_pad), jnp.float32).at[src_idx, cols].set(1.0)
    dst_sel = jnp.zeros((n_nodes, e_pad), jnp.float32).at[dst_idx, cols].set(1.0)
    return src_sel, dst_sel


# --------------------------------- reference -------------------------------- #

def reference_forward(params, a_norm, pos_edges, neg_edges, x):
    """Pure-JAX f32 reference of Model.forward."""
    h = x
    for wk, bk, relu in (("w1", "b1", True), ("w2", "b2", True), ("w3", "b3", False)):
        acc = jnp.zeros((x.shape[0], params[wk].shape[2]), jnp.float32)
        for r in range(a_norm.shape[0]):
            acc = acc + a_norm[r] @ (h @ params[wk][r]) + params[bk][r]
        h = jnp.maximum(acc, 0.0) if relu else acc
    ps, pd = pos_edges
    ns, nd = neg_edges
    pos = jnp.sum(h[ps] * h[pd], axis=-1, keepdims=True)
    neg = jnp.sum(h[ns] * h[nd], axis=-1, keepdims=True)
    return pos, neg


# ------------------------------------ main ---------------------------------- #

if __name__ == "__main__":
    key = jax.random.PRNGKey(0)

    # Small synthetic hetero graph: one node type ('Person'), R relations.
    N_NODES = 16
    N_REL = 2
    E_PER_REL = 24
    IN_FEATS, HID1, HID2, OUT_FEATS = 8, 32, 32, 16

    keys = jax.random.split(key, 16)

    # Edges per relation (deterministic).
    rel_src, rel_dst = [], []
    for r in range(N_REL):
        rel_src.append(jax.random.randint(keys[r], (E_PER_REL,), 0, N_NODES))
        rel_dst.append(jax.random.randint(keys[N_REL + r], (E_PER_REL,), 0, N_NODES))

    a_norm = jnp.stack(
        [build_norm_adjacency(rel_src[r], rel_dst[r], N_NODES) for r in range(N_REL)],
        axis=0)                                                           # (R, N, N)

    # Predictor operates on etype = relation 0 of g; neg_g has its own edges.
    neg_src = jax.random.randint(keys[4], (E_PER_REL,), 0, N_NODES)
    neg_dst = jax.random.randint(keys[5], (E_PER_REL,), 0, N_NODES)
    src_sel, dst_sel = build_edge_selectors(
        jnp.concatenate([rel_src[0], neg_src]),
        jnp.concatenate([rel_dst[0], neg_dst]),
        N_NODES)                                                          # (N, 128) each

    # Deterministic parameter init (per-relation GraphConv weights + biases).
    def winit(k, shape, scale=0.1):
        return (scale * jax.random.normal(k, shape)).astype(jnp.float32)

    params = {
        "w1": winit(keys[6], (N_REL, IN_FEATS, HID1)),
        "b1": winit(keys[7], (N_REL, 1, HID1), 0.01),
        "w2": winit(keys[8], (N_REL, HID1, HID2)),
        "b2": winit(keys[9], (N_REL, 1, HID2), 0.01),
        "w3": winit(keys[10], (N_REL, HID2, OUT_FEATS)),
        "b3": winit(keys[11], (N_REL, 1, OUT_FEATS), 0.01),
    }

    # Input node features x['Person'].
    x = winit(keys[12], (N_NODES, IN_FEATS), 1.0)

    # One-time prep (per-graph constants + prepped params), then jitted forward.
    graph = prepare_graph(a_norm, src_sel, dst_sel)
    prep = prepare_params(params)
    fwd = jax.jit(functools.partial(model_forward, n_pos=E_PER_REL, n_neg=E_PER_REL))

    pos_score, neg_score = fwd(prep, graph, x)
    jax.block_until_ready((pos_score, neg_score))

    assert pos_score.shape == (E_PER_REL, 1) and neg_score.shape == (E_PER_REL, 1)
    assert bool(jnp.all(jnp.isfinite(pos_score))) and bool(jnp.all(jnp.isfinite(neg_score)))

    # Loose-tolerance check vs. the pure-f32 reference (kernel runs bf16 on MXU).
    pos_ref, neg_ref = reference_forward(
        params, a_norm, (rel_src[0], rel_dst[0]), (neg_src, neg_dst), x)
    scale = float(jnp.maximum(jnp.max(jnp.abs(pos_ref)), jnp.max(jnp.abs(neg_ref))))
    tol = 5e-2 * max(1.0, scale)
    err = float(jnp.maximum(jnp.max(jnp.abs(pos_ref - pos_score)),
                            jnp.max(jnp.abs(neg_ref - neg_score))))
    assert err <= tol, f"kernel/reference mismatch: max_abs_err={err} > tol={tol}"

    print("KERNEL_OK")
</pallas_src>

<mosaic_0001>
module attributes {stable_mosaic.version = 11 : i64} {
  func.func @_fused_rgcn_kernel(%arg0: i32, %arg1: memref<16x32xbf16, #tpu.memory_space<vmem>>, %arg2: memref<16x8xbf16, #tpu.memory_space<vmem>>, %arg3: memref<2x8x32xbf16, #tpu.memory_space<vmem>>, %arg4: memref<2x32x32xbf16, #tpu.memory_space<vmem>>, %arg5: memref<2x32x16xbf16, #tpu.memory_space<vmem>>, %arg6: memref<1x32xf32, #tpu.memory_space<vmem>>, %arg7: memref<1x32xf32, #tpu.memory_space<vmem>>, %arg8: memref<1x16xf32, #tpu.memory_space<vmem>>, %arg9: memref<16x128xbf16, #tpu.memory_space<vmem>>, %arg10: memref<16x128xbf16, #tpu.memory_space<vmem>>, %arg11: memref<1x128xf32, #tpu.memory_space<vmem>>) attributes {dimension_semantics = [#tpu.dimension_semantics<parallel>], iteration_bounds = array<i64: 1>, scalar_prefetch = 0 : i64, scratch_operands = 0 : i64, tpu.core_type = #tpu.core_type<tc>, window_params = [{pipeline_mode = #tpu.pipeline_mode<synchronous>, transform_indices = @transform_0, window_bounds = array<i64: 16, 32>}, {pipeline_mode = #tpu.pipeline_mode<synchronous>, transform_indices = @transform_1, window_bounds = array<i64: 16, 8>}, {pipeline_mode = #tpu.pipeline_mode<synchronous>, transform_indices = @transform_2, window_bounds = array<i64: 2, 8, 32>}, {pipeline_mode = #tpu.pipeline_mode<synchronous>, transform_indices = @transform_3, window_bounds = array<i64: 2, 32, 32>}, {pipeline_mode = #tpu.pipeline_mode<synchronous>, transform_indices = @transform_4, window_bounds = array<i64: 2, 32, 16>}, {pipeline_mode = #tpu.pipeline_mode<synchronous>, transform_indices = @transform_5, window_bounds = array<i64: 1, 32>}, {pipeline_mode = #tpu.pipeline_mode<synchronous>, transform_indices = @transform_6, window_bounds = array<i64: 1, 32>}, {pipeline_mode = #tpu.pipeline_mode<synchronous>, transform_indices = @transform_7, window_bounds = array<i64: 1, 16>}, {transform_indices = @transform_8, window_bounds = array<i64: 16, 128>}, {transform_indices = @transform_9, window_bounds = array<i64: 16, 128>}, {transform_indices = @transform_10, window_bounds = array<i64: 1, 128>}]} {
    %c0 = arith.constant 0 : index
    %c0_0 = arith.constant 0 : index
    %0 = vector.load %arg1[%c0, %c0_0] : memref<16x32xbf16, #tpu.memory_space<vmem>>, vector<16x32xbf16>
    %c0_1 = arith.constant 0 : index
    %c0_2 = arith.constant 0 : index
    %1 = vector.load %arg2[%c0_1, %c0_2] : memref<16x8xbf16, #tpu.memory_space<vmem>>, vector<16x8xbf16>
    %c0_3 = arith.constant 0 : index
    %c0_4 = arith.constant 0 : index
    %c0_5 = arith.constant 0 : index
    %2 = vector.load %arg3[%c0_3, %c0_4, %c0_5] : memref<2x8x32xbf16, #tpu.memory_space<vmem>>, vector<1x8x32xbf16>
    %3 = vector.shape_cast %2 : vector<1x8x32xbf16> to vector<8x32xbf16>
    %cst = arith.constant dense<0.000000e+00> : vector<16x32xf32>
    %4 = tpu.matmul %1, %3, %cst {dimension_numbers = #tpu.dot_dimension_numbers<[1], [0], [0], [1], [0, 0, 1, 1], [], []>} : vector<16x8xbf16>, vector<8x32xbf16>, vector<16x32xf32> -> vector<16x32xf32>
    %c1 = arith.constant 1 : index
    %c0_6 = arith.constant 0 : index
    %c0_7 = arith.constant 0 : index
    %5 = vector.load %arg3[%c1, %c0_6, %c0_7] : memref<2x8x32xbf16, #tpu.memory_space<vmem>>, vector<1x8x32xbf16>
    %6 = vector.shape_cast %5 : vector<1x8x32xbf16> to vector<8x32xbf16>
    %cst_8 = arith.constant dense<0.000000e+00> : vector<16x32xf32>
    %7 = tpu.matmul %1, %6, %cst_8 {dimension_numbers = #tpu.dot_dimension_numbers<[1], [0], [0], [1], [0, 0, 1, 1], [], []>} : vector<16x8xbf16>, vector<8x32xbf16>, vector<16x32xf32> -> vector<16x32xf32>
    %8 = tpu.concatenate %4, %7 in 0 : vector<16x32xf32>, vector<16x32xf32> -> vector<32x32xf32>
    %9 = arith.truncf %8 : vector<32x32xf32> to vector<32x32xbf16>
    %cst_9 = arith.constant dense<0.000000e+00> : vector<16x32xf32>
    %10 = tpu.matmul %0, %9, %cst_9 {dimension_numbers = #tpu.dot_dimension_numbers<[1], [0], [0], [1], [0, 0, 1, 1], [], []>} : vector<16x32xbf16>, vector<32x32xbf16>, vector<16x32xf32> -> vector<16x32xf32>
    %c0_10 = arith.constant 0 : index
    %c0_11 = arith.constant 0 : index
    %11 = vector.load %arg6[%c0_10, %c0_11] : memref<1x32xf32, #tpu.memory_space<vmem>>, vector<1x32xf32>
    %12 = vector.broadcast %11 : vector<1x32xf32> to vector<16x32xf32>
    %13 = arith.addf %10, %12 : vector<16x32xf32>
    %cst_12 = arith.constant 0.000000e+00 : f32
    %14 = vector.broadcast %cst_12 : f32 to vector<16x32xf32>
    %15 = arith.maximumf %13, %14 : vector<16x32xf32>
    %16 = arith.truncf %15 : vector<16x32xf32> to vector<16x32xbf16>
    %c0_13 = arith.constant 0 : index
    %c0_14 = arith.constant 0 : index
    %c0_15 = arith.constant 0 : index
    %17 = vector.load %arg4[%c0_13, %c0_14, %c0_15] : memref<2x32x32xbf16, #tpu.memory_space<vmem>>, vector<1x32x32xbf16>
    %18 = vector.shape_cast %17 : vector<1x32x32xbf16> to vector<32x32xbf16>
    %cst_16 = arith.constant dense<0.000000e+00> : vector<16x32xf32>
    %19 = tpu.matmul %16, %18, %cst_16 {dimension_numbers = #tpu.dot_dimension_numbers<[1], [0], [0], [1], [0, 0, 1, 1], [], []>} : vector<16x32xbf16>, vector<32x32xbf16>, vector<16x32xf32> -> vector<16x32xf32>
    %c1_17 = arith.constant 1 : index
    %c0_18 = arith.constant 0 : index
    %c0_19 = arith.constant 0 : index
    %20 = vector.load %arg4[%c1_17, %c0_18, %c0_19] : memref<2x32x32xbf16, #tpu.memory_space<vmem>>, vector<1x32x32xbf16>
    %21 = vector.shape_cast %20 : vector<1x32x32xbf16> to vector<32x32xbf16>
    %cst_20 = arith.constant dense<0.000000e+00> : vector<16x32xf32>
    %22 = tpu.matmul %16, %21, %cst_20 {dimension_numbers = #tpu.dot_dimension_numbers<[1], [0], [0], [1], [0, 0, 1, 1], [], []>} : vector<16x32xbf16>, vector<32x32xbf16>, vector<16x32xf32> -> vector<16x32xf32>
    %23 = tpu.concatenate %19, %22 in 0 : vector<16x32xf32>, vector<16x32xf32> -> vector<32x32xf32>
    %24 = arith.truncf %23 : vector<32x32xf32> to vector<32x32xbf16>
    %cst_21 = arith.constant dense<0.000000e+00> : vector<16x32xf32>
    %25 = tpu.matmul %0, %24, %cst_21 {dimension_numbers = #tpu.dot_dimension_numbers<[1], [0], [0], [1], [0, 0, 1, 1], [], []>} : vector<16x32xbf16>, vector<32x32xbf16>, vector<16x32xf32> -> vector<16x32xf32>
    %c0_22 = arith.constant 0 : index
    %c0_23 = arith.constant 0 : index
    %26 = vector.load %arg7[%c0_22, %c0_23] : memref<1x32xf32, #tpu.memory_space<vmem>>, vector<1x32xf32>
    %27 = vector.broadcast %26 : vector<1x32xf32> to vector<16x32xf32>
    %28 = arith.addf %25, %27 : vector<16x32xf32>
    %cst_24 = arith.constant 0.000000e+00 : f32
    %29 = vector.broadcast %cst_24 : f32 to vector<16x32xf32>
    %30 = arith.maximumf %28, %29 : vector<16x32xf32>
    %31 = arith.truncf %30 : vector<16x32xf32> to vector<16x32xbf16>
    %c0_25 = arith.constant 0 : index
    %c0_26 = arith.constant 0 : index
    %c0_27 = arith.constant 0 : index
    %32 = vector.load %arg5[%c0_25, %c0_26, %c0_27] : memref<2x32x16xbf16, #tpu.memory_space<vmem>>, vector<1x32x16xbf16>
    %33 = vector.shape_cast %32 : vector<1x32x16xbf16> to vector<32x16xbf16>
    %cst_28 = arith.constant dense<0.000000e+00> : vector<16x16xf32>
    %34 = tpu.matmul %31, %33, %cst_28 {dimension_numbers = #tpu.dot_dimension_numbers<[1], [0], [0], [1], [0, 0, 1, 1], [], []>} : vector<16x32xbf16>, vector<32x16xbf16>, vector<16x16xf32> -> vector<16x16xf32>
    %c1_29 = arith.constant 1 : index
    %c0_30 = arith.constant 0 : index
    %c0_31 = arith.constant 0 : index
    %35 = vector.load %arg5[%c1_29, %c0_30, %c0_31] : memref<2x32x16xbf16, #tpu.memory_space<vmem>>, vector<1x32x16xbf16>
    %36 = vector.shape_cast %35 : vector<1x32x16xbf16> to vector<32x16xbf16>
    %cst_32 = arith.constant dense<0.000000e+00> : vector<16x16xf32>
    %37 = tpu.matmul %31, %36, %cst_32 {dimension_numbers = #tpu.dot_dimension_numbers<[1], [0], [0], [1], [0, 0, 1, 1], [], []>} : vector<16x32xbf16>, vector<32x16xbf16>, vector<16x16xf32> -> vector<16x16xf32>
    %38 = tpu.concatenate %34, %37 in 0 : vector<16x16xf32>, vector<16x16xf32> -> vector<32x16xf32>
    %39 = arith.truncf %38 : vector<32x16xf32> to vector<32x16xbf16>
    %cst_33 = arith.constant dense<0.000000e+00> : vector<16x16xf32>
    %40 = tpu.matmul %0, %39, %cst_33 {dimension_numbers = #tpu.dot_dimension_numbers<[1], [0], [0], [1], [0, 0, 1, 1], [], []>} : vector<16x32xbf16>, vector<32x16xbf16>, vector<16x16xf32> -> vector<16x16xf32>
    %c0_34 = arith.constant 0 : index
    %c0_35 = arith.constant 0 : index
    %41 = vector.load %arg8[%c0_34, %c0_35] : memref<1x16xf32, #tpu.memory_space<vmem>>, vector<1x16xf32>
    %42 = vector.broadcast %41 : vector<1x16xf32> to vector<16x16xf32>
    %43 = arith.addf %40, %42 : vector<16x16xf32>
    %44 = arith.truncf %43 : vector<16x16xf32> to vector<16x16xbf16>
    %c0_36 = arith.constant 0 : index
    %c0_37 = arith.constant 0 : index
    %45 = vector.load %arg9[%c0_36, %c0_37] : memref<16x128xbf16, #tpu.memory_space<vmem>>, vector<16x128xbf16>
    %c0_38 = arith.constant 0 : index
    %c0_39 = arith.constant 0 : index
    %46 = vector.load %arg10[%c0_38, %c0_39] : memref<16x128xbf16, #tpu.memory_space<vmem>>, vector<16x128xbf16>
    %47 = tpu.concatenate %45, %46 in 1 : vector<16x128xbf16>, vector<16x128xbf16> -> vector<16x256xbf16>
    %cst_40 = arith.constant dense<0.000000e+00> : vector<16x256xf32>
    %48 = tpu.matmul %44, %47, %cst_40 {dimension_numbers = #tpu.dot_dimension_numbers<[0], [0], [1], [1], [0, 1, 1, 1], [], []>} : vector<16x16xbf16>, vector<16x256xbf16>, vector<16x256xf32> -> vector<16x256xf32>
    %49 = vector.extract_strided_slice %48 {offsets = [0, 0], sizes = [16, 128], strides = [1, 1]} : vector<16x256xf32> to vector<16x128xf32>
    %50 = vector.extract_strided_slice %48 {offsets = [0, 128], sizes = [16, 128], strides = [1, 1]} : vector<16x256xf32> to vector<16x128xf32>
    %51 = arith.mulf %49, %50 : vector<16x128xf32>
    %cst_41 = arith.constant dense<0.000000e+00> : vector<128xf32>
    %52 = vector.multi_reduction <add>, %51, %cst_41 [0] : vector<16x128xf32> to vector<128xf32>
    %53 = vector.shape_cast %52 : vector<128xf32> to vector<1x128xf32>
    %c0_42 = arith.constant 0 : index
    %c0_43 = arith.constant 0 : index
    %54 = vector.load %arg11[%c0_42, %c0_43] : memref<1x128xf32, #tpu.memory_space<vmem>>, vector<1x128xf32>
    tpu.vector_store %arg11[%c0_42, %c0_43], %53 {strides = array<i32>} : memref<1x128xf32, #tpu.memory_space<vmem>>, vector<1x128xf32>,
    return
  }
  func.func @transform_0(%arg0: i32) -> (i32, i32) {
    %c0_i32 = arith.constant 0 : i32
    %c0_i32_0 = arith.constant 0 : i32
    %c0_i32_1 = arith.constant 0 : i32
    return %c0_i32, %c0_i32_0 : i32, i32
  }
  func.func @transform_1(%arg0: i32) -> (i32, i32) {
    %c0_i32 = arith.constant 0 : i32
    %c0_i32_0 = arith.constant 0 : i32
    %c0_i32_1 = arith.constant 0 : i32
    return %c0_i32, %c0_i32_0 : i32, i32
  }
  func.func @transform_2(%arg0: i32) -> (i32, i32, i32) {
    %c0_i32 = arith.constant 0 : i32
    %c0_i32_0 = arith.constant 0 : i32
    %c0_i32_1 = arith.constant 0 : i32
    %c0_i32_2 = arith.constant 0 : i32
    return %c0_i32, %c0_i32_0, %c0_i32_1 : i32, i32, i32
  }
  func.func @transform_3(%arg0: i32) -> (i32, i32, i32) {
    %c0_i32 = arith.constant 0 : i32
    %c0_i32_0 = arith.constant 0 : i32
    %c0_i32_1 = arith.constant 0 : i32
    %c0_i32_2 = arith.constant 0 : i32
    return %c0_i32, %c0_i32_0, %c0_i32_1 : i32, i32, i32
  }
  func.func @transform_4(%arg0: i32) -> (i32, i32, i32) {
    %c0_i32 = arith.constant 0 : i32
    %c0_i32_0 = arith.constant 0 : i32
    %c0_i32_1 = arith.constant 0 : i32
    %c0_i32_2 = arith.constant 0 : i32
    return %c0_i32, %c0_i32_0, %c0_i32_1 : i32, i32, i32
  }
  func.func @transform_5(%arg0: i32) -> (i32, i32) {
    %c0_i32 = arith.constant 0 : i32
    %c0_i32_0 = arith.constant 0 : i32
    %c0_i32_1 = arith.constant 0 : i32
    return %c0_i32, %c0_i32_0 : i32, i32
  }
  func.func @transform_6(%arg0: i32) -> (i32, i32) {
    %c0_i32 = arith.constant 0 : i32
    %c0_i32_0 = arith.constant 0 : i32
    %c0_i32_1 = arith.constant 0 : i32
    return %c0_i32, %c0_i32_0 : i32, i32
  }
  func.func @transform_7(%arg0: i32) -> (i32, i32) {
    %c0_i32 = arith.constant 0 : i32
    %c0_i32_0 = arith.constant 0 : i32
    %c0_i32_1 = arith.constant 0 : i32
    return %c0_i32, %c0_i32_0 : i32, i32
  }
  func.func @transform_8(%arg0: i32) -> (i32, i32) {
    %c0_i32 = arith.constant 0 : i32
    %c0_i32_0 = arith.constant 0 : i32
    return %c0_i32, %arg0 : i32, i32
  }
  func.func @transform_9(%arg0: i32) -> (i32, i32) {
    %c0_i32 = arith.constant 0 : i32
    %c0_i32_0 = arith.constant 0 : i32
    return %c0_i32, %arg0 : i32, i32
  }
  func.func @transform_10(%arg0: i32) -> (i32, i32) {
    %c0_i32 = arith.constant 0 : i32
    %c0_i32_0 = arith.constant 0 : i32
    return %c0_i32, %arg0 : i32, i32
  }
}

</mosaic_0001>

<llo_original>
// kernel: model_forward.1
$region0: #{model_forward.1}
  #allocation0 [shape = 'u32[]', space=smem, size = 0x4, offset = 0x4, fixed_abs, tag = 'smem constant byte address 0x4 - core index']
  #allocation1 [shape = 'u32[72,128]{1,0:T(1,128)}', space=vmem, size = 0x9000, scoped, tag = 'internal scratch']
  %s0 = inlined_call_operand.vmem [shape: bf16[16,32], index: 0, kind: input, shape index: {}]
  %s1 = inlined_call_operand.vmem [shape: bf16[16,8], index: 1, kind: input, shape index: {}]
  %s2 = inlined_call_operand.vmem [shape: bf16[2,8,32], index: 2, kind: input, shape index: {}]
  %s3 = inlined_call_operand.vmem [shape: bf16[2,32,32], index: 3, kind: input, shape index: {}]
  %s4 = inlined_call_operand.vmem [shape: bf16[2,32,16], index: 4, kind: input, shape index: {}]
  %s5 = inlined_call_operand.hbm [shape: f32[1,32], index: 5, kind: input, shape index: {}]
  %s6 = inlined_call_operand.hbm [shape: f32[1,32], index: 6, kind: input, shape index: {}]
  %s7 = inlined_call_operand.hbm [shape: f32[1,16], index: 7, kind: input, shape index: {}]
  %s8 = inlined_call_operand.vmem [shape: bf16[16,128], index: 8, kind: input, shape index: {}]
  %s9 = inlined_call_operand.hbm [shape: bf16[16,128], index: 9, kind: input, shape index: {}]
  %s10 = inlined_call_operand.vmem [shape: f32[1,128], index: 10, kind: output, shape index: {}]
  %s11 = sld [smem:[#allocation0]]
  $region66: #{model_forward.1} parent=0
    _
  %s13 = ssub.s32 1, %s11
  %s14 = scalar_select 0, %s13, %s11
  $region1: #{model_forward.1} parent=0
    #allocation2 [shape = 'u8[512]{0}', space=vmem, size = 0x400, scoped, tag = 'input window, operand 5, single buffered']
    #allocation3 [shape = 's32[1]{0}', space=sflag, size = 0x4, scoped, tag = 'scoped memory for model_forward.1']
    #allocation4 [shape = 'u8[512]{0}', space=vmem, size = 0x400, scoped, tag = 'input window, operand 6, single buffered']
    #allocation5 [shape = 's32[1]{0}', space=sflag, size = 0x4, scoped, tag = 'scoped memory for model_forward.1']
    #allocation6 [shape = 'u8[512]{0}', space=vmem, size = 0x400, scoped, tag = 'input window, operand 7, single buffered']
    #allocation7 [shape = 'u8[4096]{0}', space=vmem, size = 0x1000, scoped, tag = 'input window, operand 9, single buffered']
    #allocation8 [shape = 's32[1]{0}', space=sflag, size = 0x4, scoped, tag = 'scoped memory for model_forward.1']
    %15 = vsyncpa [#allocation3], 0
    %16 = vsyncpa [#allocation5], 0
    %17 = vsyncpa [#allocation8], 0
    // Predicated region
    $region2: #{model_forward.1} parent=1 // pred_check
      _
    $region3: #{model_forward.1} parent=1 // pred_check_branch
      %19 = sbr.rel (0) target = $region5
    $region4: #{model_forward.1} parent=1 // pred_region
      _
    $region5: #{model_forward.1} parent=1 // pred_fallthru
      _
    // Predicated region
    $region6: #{model_forward.1} parent=1 // pred_check
      _
    $region7: #{model_forward.1} parent=1 // pred_check_branch
      %21 = sbr.rel (0) target = $region9
    $region8: #{model_forward.1} parent=1 // pred_region
      _
    $region9: #{model_forward.1} parent=1 // pred_fallthru
      _
    // Predicated region
    $region10: #{model_forward.1} parent=1 // pred_check
      _
    $region11: #{model_forward.1} parent=1 // pred_check_branch
      %23 = sbr.rel (0) target = $region13
    $region12: #{model_forward.1} parent=1 // pred_region
      _
    $region13: #{model_forward.1} parent=1 // pred_fallthru
      _
    // Predicated region
    $region14: #{model_forward.1} parent=1 // pred_check
      _
    $region15: #{model_forward.1} parent=1 // pred_check_branch
      %25 = sbr.rel (0) target = $region17
    $region16: #{model_forward.1} parent=1 // pred_region
      _
    $region17: #{model_forward.1} parent=1 // pred_fallthru
      _
    // Predicated region
    $region18: #{model_forward.1} parent=1 // pred_check
      _
    $region19: #{model_forward.1} parent=1 // pred_check_branch
      %27 = sbr.rel (0) target = $region21
    $region20: #{model_forward.1} parent=1 // pred_region
      _
    $region21: #{model_forward.1} parent=1 // pred_fallthru
      _
    // Predicated region
    $region22: #{model_forward.1} parent=1 // pred_check
      _
    $region23: #{model_forward.1} parent=1 // pred_check_branch
      %29 = sbr.rel (0) target = $region25
    $region24: #{model_forward.1} parent=1 // pred_region
      %31 = vsyncadd [#allocation3], 0
      %s33 = sshll.u32 %s5, 4
      %s34 = int_to_ptr.hbm [resolvable:$true] %s33
      %s35 = sshll.u32 [#allocation2], 4
      %s36 = int_to_ptr.vmem [resolvable:$true] %s35
      %38 = dma.hbm_to_vmem [thread:$0]  %s34, 16, %s36, [#allocation3]
    $region25: #{model_forward.1} parent=1 // pred_fallthru
      _
    // Predicated region
    $region26: #{model_forward.1} parent=1 // pred_check
      _
    $region27: #{model_forward.1} parent=1 // pred_check_branch
      %40 = sbr.rel (0) target = $region29
    $region28: #{model_forward.1} parent=1 // pred_region
      %42 = vsyncadd [#allocation5], 0
      %s44 = sshll.u32 %s6, 4
      %s45 = int_to_ptr.hbm [resolvable:$true] %s44
      %s46 = sshll.u32 [#allocation4], 4
      %s47 = int_to_ptr.vmem [resolvable:$true] %s46
      %49 = dma.hbm_to_vmem [thread:$0]  %s45, 16, %s47, [#allocation5]
    $region29: #{model_forward.1} parent=1 // pred_fallthru
      _
    // Predicated region
    $region30: #{model_forward.1} parent=1 // pred_check
      _
    $region31: #{model_forward.1} parent=1 // pred_check_branch
      %51 = sbr.rel (0) target = $region33
    $region32: #{model_forward.1} parent=1 // pred_region
      %53 = vsyncadd [#allocation5], 0
      %s55 = sshll.u32 %s7, 4
      %s56 = int_to_ptr.hbm [resolvable:$true] %s55
      %s57 = sshll.u32 [#allocation6], 4
      %s58 = int_to_ptr.vmem [resolvable:$true] %s57
      %60 = dma.hbm_to_vmem [thread:$0]  %s56, 16, %s58, [#allocation5]
    $region33: #{model_forward.1} parent=1 // pred_fallthru
      _
    // Predicated region
    $region34: #{model_forward.1} parent=1 // pred_check
      _
    $region35: #{model_forward.1} parent=1 // pred_check_branch
      %62 = sbr.rel (0) target = $region37
    $region36: #{model_forward.1} parent=1 // pred_region
      _
    $region37: #{model_forward.1} parent=1 // pred_fallthru
      _
    // Predicated region
    $region38: #{model_forward.1} parent=1 // pred_check
      _
    $region39: #{model_forward.1} parent=1 // pred_check_branch
      %64 = sbr.rel (0) target = $region41
    $region40: #{model_forward.1} parent=1 // pred_region
      %66 = vsyncadd [#allocation8], 0
      %s67 = sshll.u32 %s9, 4
      %s68 = int_to_ptr.hbm [resolvable:$true] %s67
      %s69 = sshll.u32 [#allocation7], 4
      %s70 = int_to_ptr.vmem [resolvable:$true] %s69
      %75 = dma.hbm_to_vmem [thread:$0]  %s68, 128, %s70, [#allocation8], 64, 64, 4
    $region41: #{model_forward.1} parent=1 // pred_fallthru
      _
    // Predicated region
    $region42: #{model_forward.1} parent=1 // pred_check
      _
    $region43: #{model_forward.1} parent=1 // pred_check_branch
      %77 = sbr.rel (0) target = $region45
    $region44: #{model_forward.1} parent=1 // pred_region
      %79 = dma.done [#allocation3], 16
    $region45: #{model_forward.1} parent=1 // pred_fallthru
      _
    // Predicated region
    $region46: #{model_forward.1} parent=1 // pred_check
      _
    $region47: #{model_forward.1} parent=1 // pred_check_branch
      %81 = sbr.rel (0) target = $region49
    $region48: #{model_forward.1} parent=1 // pred_region
      %83 = dma.done [#allocation5], 16
    $region49: #{model_forward.1} parent=1 // pred_fallthru
      _
    // Predicated region
    $region50: #{model_forward.1} parent=1 // pred_check
      _
    $region51: #{model_forward.1} parent=1 // pred_check_branch
      %85 = sbr.rel (0) target = $region53
    $region52: #{model_forward.1} parent=1 // pred_region
      %87 = dma.done [#allocation5], 16
    $region53: #{model_forward.1} parent=1 // pred_fallthru
      _
    // Predicated region
    $region54: #{model_forward.1} parent=1 // pred_check
      _
    $region55: #{model_forward.1} parent=1 // pred_check_branch
      %89 = sbr.rel (0) target = $region57
    $region56: #{model_forward.1} parent=1 // pred_region
      %91 = dma.done [#allocation8], 128
    $region57: #{model_forward.1} parent=1 // pred_fallthru
      _
    %v93 = vld [vmem:[%s0] sm:$0xf]
    %v94 = vld [vmem:[%s0 + $0x4] sm:$0xf]
    %v95 = vld [vmem:[%s1] sm:$0xf]
    %v96 = vld [vmem:[%s1 + $0x4] sm:$0xf]
    %v97 = vld [vmem:[%s2] sm:$0xf]
    %v100 = vunpack.c.l.b16 %v95
    %v101 = vunpack.c.l.b16 %v96
    %v102 = vpack.c.b16 %v101, %v100
    %vm103 = vcmask 64512
    %v105 = vsel %vm103, %v102, 0
    %vm107 = vcmask 1043456
    %v109 = vsel %vm107, %v97, 0
    %111 = vmatpush.bf16.msra.mxu0 0
    %112 = vmatpush.bf16.msra.mxu0 0
    %113 = vmatpush.bf16.msra.mxu0 0
    %114 = vmatpush.bf16.msra.mxu0 0
    %115 = vmatpush.bf16.msra.mxu0 0
    %116 = vmatpush.bf16.msra.mxu0 0
    %117 = vmatpush.bf16.msra.mxu0 0
    %118 = vmatpush.bf16.msra.mxu0 %v109
    %119 = vmatmul.bf16.gmra.mxu0 %v105
    %v120 = vpop.f32.mrf.mxu0
    %v121 = vadd.f32 0.0, %v120
    %v122 = vpop.f32.mrf.mxu0
    %v123 = vadd.f32 0.0, %v122
    %124 = vdwg.mxu0
    %s125 = scalar_lea.vmem %s2, 4
    %v126 = vld [vmem:[%s125] sm:$0xf]
    %v128 = vsel %vm107, %v126, 0
    %130 = vmatpush.bf16.msra.mxu0 0
    %131 = vmatpush.bf16.msra.mxu0 0
    %132 = vmatpush.bf16.msra.mxu0 0
    %133 = vmatpush.bf16.msra.mxu0 0
    %134 = vmatpush.bf16.msra.mxu0 0
    %135 = vmatpush.bf16.msra.mxu0 0
    %136 = vmatpush.bf16.msra.mxu0 0
    %137 = vmatpush.bf16.msra.mxu0 %v128
    %138 = vmatmul.bf16.gmra.mxu0 %v105
    %v139 = vpop.f32.mrf.mxu0
    %v140 = vadd.f32 0.0, %v139
    %v141 = vpop.f32.mrf.mxu0
    %v142 = vadd.f32 0.0, %v141
    %143 = vdwg.mxu0
    %v144 = vpack.c.bf16 %v123, %v121
    %v145 = vpack.c.bf16 %v142, %v140
    %v146 = vld [vmem:[#allocation2] sm:$0x1]
    %v148 = vperm.slane %v146, 0
    %v152 = vunpack.c.l.b16 %v93
    %v153 = vunpack.c.l.b16 %v94
    %v154 = vpack.c.b16 %v153, %v152
    %vm155 = vcmask 261120
    %v157 = vsel %vm155, %v154, 0
    %159 = vmatpush.bf16.msra.mxu0 0
    %160 = vmatpush.bf16.msra.mxu0 0
    %161 = vmatpush.bf16.msra.mxu0 0
    %162 = vmatpush.bf16.msra.mxu0 0
    %163 = vmatpush.bf16.msra.mxu0 0
    %164 = vmatpush.bf16.msra.mxu0 0
    %165 = vmatpush.bf16.msra.mxu0 %v145
    %166 = vmatpush.bf16.msra.mxu0 %v144
    %167 = vmatmul.bf16.gmra.mxu0 %v157
    %v168 = vpop.f32.mrf.mxu0
    %v169 = vadd.f32 %v148, %v168
    %v170 = vpop.f32.mrf.mxu0
    %v171 = vadd.f32 %v148, %v170
    %172 = vdwg.mxu0
    %v173 = vmax.f32 %v169, 0.0
    %v174 = vmax.f32 %v171, 0.0
    %v175 = vpack.c.bf16 %v174, %v173
    %v176 = vld [vmem:[%s3] sm:$0xf]
    %v177 = vld [vmem:[%s3 + $0x4] sm:$0xf]
    %v178 = vld [vmem:[%s3 + $0x8] sm:$0xf]
    %v179 = vld [vmem:[%s3 + $0xc] sm:$0xf]
    %v184 = vunpack.c.l.b16 %v176
    %v185 = vunpack.c.l.b16 %v177
    %v186 = vunpack.c.l.b16 %v178
    %v187 = vunpack.c.l.b16 %v179
    %v188 = vpack.c.b16 %v185, %v184
    %v189 = vpack.c.b16 %v187, %v186
    %v193 = vsel %vm155, %v175, 0
    %195 = vmatpush.bf16.msra.mxu0 0
    %196 = vmatpush.bf16.msra.mxu0 0
    %197 = vmatpush.bf16.msra.mxu0 0
    %198 = vmatpush.bf16.msra.mxu0 0
    %199 = vmatpush.bf16.msra.mxu0 0
    %200 = vmatpush.bf16.msra.mxu0 0
    %201 = vmatpush.bf16.msra.mxu0 %v189
    %202 = vmatpush.bf16.msra.mxu0 %v188
    %203 = vmatmul.bf16.gmra.mxu0 %v193
    %v204 = vpop.f32.mrf.mxu0
    %v205 = vadd.f32 0.0, %v204
    %v206 = vpop.f32.mrf.mxu0
    %v207 = vadd.f32 0.0, %v206
    %208 = vdwg.mxu0
    %s209 = scalar_lea.vmem %s3, 16
    %v210 = vld [vmem:[%s209] sm:$0xf]
    %v211 = vld [vmem:[%s209 + $0x4] sm:$0xf]
    %v212 = vld [vmem:[%s209 + $0x8] sm:$0xf]
    %v213 = vld [vmem:[%s209 + $0xc] sm:$0xf]
    %v218 = vunpack.c.l.b16 %v210
    %v219 = vunpack.c.l.b16 %v211
    %v220 = vunpack.c.l.b16 %v212
    %v221 = vunpack.c.l.b16 %v213
    %v222 = vpack.c.b16 %v219, %v218
    %v223 = vpack.c.b16 %v221, %v220
    %226 = vmatpush.bf16.msra.mxu0 0
    %227 = vmatpush.bf16.msra.mxu0 0
    %228 = vmatpush.bf16.msra.mxu0 0
    %229 = vmatpush.bf16.msra.mxu0 0
    %230 = vmatpush.bf16.msra.mxu0 0
    %231 = vmatpush.bf16.msra.mxu0 0
    %232 = vmatpush.bf16.msra.mxu0 %v223
    %233 = vmatpush.bf16.msra.mxu0 %v222
    %234 = vmatmul.bf16.gmra.mxu0 %v193
    %v235 = vpop.f32.mrf.mxu0
    %v236 = vadd.f32 0.0, %v235
    %v237 = vpop.f32.mrf.mxu0
    %v238 = vadd.f32 0.0, %v237
    %239 = vdwg.mxu0
    %v240 = vpack.c.bf16 %v207, %v205
    %v241 = vpack.c.bf16 %v238, %v236
    %v242 = vld [vmem:[#allocation4] sm:$0x1]
    %v244 = vperm.slane %v242, 0
    %246 = vmatpush.bf16.msra.mxu0 0
    %247 = vmatpush.bf16.msra.mxu0 0
    %248 = vmatpush.bf16.msra.mxu0 0
    %249 = vmatpush.bf16.msra.mxu0 0
    %250 = vmatpush.bf16.msra.mxu0 0
    %251 = vmatpush.bf16.msra.mxu0 0
    %252 = vmatpush.bf16.msra.mxu0 %v241
    %253 = vmatpush.bf16.msra.mxu0 %v240
    %254 = vmatmul.bf16.gmra.mxu0 %v157
    %v255 = vpop.f32.mrf.mxu0
    %v256 = vadd.f32 %v244, %v255
    %v257 = vpop.f32.mrf.mxu0
    %v258 = vadd.f32 %v244, %v257
    %259 = vdwg.mxu0
    %v260 = vmax.f32 %v256, 0.0
    %v261 = vmax.f32 %v258, 0.0
    %v262 = vpack.c.bf16 %v261, %v260
    %v263 = vld [vmem:[%s4] sm:$0xf]
    %v264 = vld [vmem:[%s4 + $0x4] sm:$0xf]
    %v265 = vld [vmem:[%s4 + $0x8] sm:$0xf]
    %v266 = vld [vmem:[%s4 + $0xc] sm:$0xf]
    %v271 = vunpack.c.l.b16 %v263
    %v272 = vunpack.c.l.b16 %v264
    %v273 = vunpack.c.l.b16 %v265
    %v274 = vunpack.c.l.b16 %v266
    %v275 = vpack.c.b16 %v272, %v271
    %v276 = vpack.c.b16 %v274, %v273
    %v280 = vsel %vm155, %v262, 0
    %282 = vmatpush.bf16.msra.mxu0 0
    %283 = vmatpush.bf16.msra.mxu0 0
    %284 = vmatpush.bf16.msra.mxu0 0
    %285 = vmatpush.bf16.msra.mxu0 0
    %286 = vmatpush.bf16.msra.mxu0 0
    %287 = vmatpush.bf16.msra.mxu0 0
    %288 = vmatpush.bf16.msra.mxu0 %v276
    %289 = vmatpush.bf16.msra.mxu0 %v275
    %290 = vmatmul.bf16.gmra.mxu0 %v280
    %v291 = vpop.f32.mrf.mxu0
    %v292 = vadd.f32 0.0, %v291
    %v293 = vpop.f32.mrf.mxu0
    %v294 = vadd.f32 0.0, %v293
    %295 = vdwg.mxu0
    %s296 = scalar_lea.vmem %s4, 16
    %v297 = vld [vmem:[%s296] sm:$0xf]
    %v298 = vld [vmem:[%s296 + $0x4] sm:$0xf]
    %v299 = vld [vmem:[%s296 + $0x8] sm:$0xf]
    %v300 = vld [vmem:[%s296 + $0xc] sm:$0xf]
    %v305 = vunpack.c.l.b16 %v297
    %v306 = vunpack.c.l.b16 %v298
    %v307 = vunpack.c.l.b16 %v299
    %v308 = vunpack.c.l.b16 %v300
    %v309 = vpack.c.b16 %v306, %v305
    %v310 = vpack.c.b16 %v308, %v307
    %313 = vmatpush.bf16.msra.mxu0 0
    %314 = vmatpush.bf16.msra.mxu0 0
    %315 = vmatpush.bf16.msra.mxu0 0
    %316 = vmatpush.bf16.msra.mxu0 0
    %317 = vmatpush.bf16.msra.mxu0 0
    %318 = vmatpush.bf16.msra.mxu0 0
    %319 = vmatpush.bf16.msra.mxu0 %v310
    %320 = vmatpush.bf16.msra.mxu0 %v309
    %321 = vmatmul.bf16.gmra.mxu0 %v280
    %v322 = vpop.f32.mrf.mxu0
    %v323 = vadd.f32 0.0, %v322
    %v324 = vpop.f32.mrf.mxu0
    %v325 = vadd.f32 0.0, %v324
    %326 = vdwg.mxu0
    %v327 = vpack.c.bf16 %v294, %v292
    %v328 = vpack.c.bf16 %v325, %v323
    %v329 = vld [vmem:[#allocation6] sm:$0x1]
    %v331 = vperm.slane %v329, 0
    %333 = vmatpush.bf16.msra.mxu0 0
    %334 = vmatpush.bf16.msra.mxu0 0
    %335 = vmatpush.bf16.msra.mxu0 0
    %336 = vmatpush.bf16.msra.mxu0 0
    %337 = vmatpush.bf16.msra.mxu0 0
    %338 = vmatpush.bf16.msra.mxu0 0
    %339 = vmatpush.bf16.msra.mxu0 %v328
    %340 = vmatpush.bf16.msra.mxu0 %v327
    %341 = vmatmul.bf16.gmra.mxu0 %v157
    %v342 = vpop.f32.mrf.mxu0
    %v343 = vadd.f32 %v331, %v342
    %v344 = vpop.f32.mrf.mxu0
    %v345 = vadd.f32 %v331, %v344
    %346 = vdwg.mxu0
    %v347 = vpack.c.bf16 %v345, %v343
    %v348 = vld [vmem:[%s8] sm:$0xf]
    %v349 = vld [vmem:[%s8 + $0x4] sm:$0xf]
    %v350 = vld [vmem:[#allocation7] sm:$0xf]
    %v351 = vld [vmem:[#allocation7 + $0x4] sm:$0xf]
    %v354 = vunpack.c.l.b16 %v348
    %v355 = vunpack.c.l.b16 %v349
    %v356 = vpack.c.b16 %v355, %v354
    %v360 = vunpack.c.l.b16 %v350
    %v361 = vunpack.c.l.b16 %v351
    %v362 = vpack.c.b16 %v361, %v360
    %364 = vxpose.xlu0.c.b16.start [1/8] %v347, 128
    %365 = vxpose.xlu0.c.b16.cont [2/8] 0, 128
    %366 = vxpose.xlu0.c.b16.cont [3/8] 0, 128
    %367 = vxpose.xlu0.c.b16.cont [4/8] 0, 128
    %368 = vxpose.xlu0.c.b16.cont [5/8] 0, 128
    %369 = vxpose.xlu0.c.b16.cont [6/8] 0, 128
    %370 = vxpose.xlu0.c.b16.cont [7/8] 0, 128
    %371 = vxpose.xlu0.c.b16.end [8/8] 0, 128
    %v372 = vpop.trf.xlu0
    %v373 = vpop.trf.xlu0
    %v374 = vpop.trf.xlu0
    %v375 = vpop.trf.xlu0
    %v376 = vpop.trf.xlu0
    %v377 = vpop.trf.xlu0
    %v378 = vpop.trf.xlu0
    %v379 = vpop.trf.xlu0
    %vm380 = vcmask 130048
    %v382 = vsel %vm380, %v372, 0
    %384 = vmatpush.bf16.msra.mxu0 0
    %385 = vmatpush.bf16.msra.mxu0 0
    %386 = vmatpush.bf16.msra.mxu0 0
    %387 = vmatpush.bf16.msra.mxu0 0
    %388 = vmatpush.bf16.msra.mxu0 0
    %389 = vmatpush.bf16.msra.mxu0 0
    %390 = vmatpush.bf16.msra.mxu0 0
    %391 = vmatpush.bf16.msra.mxu0 %v356
    %392 = vmatmul.bf16.gmra.mxu0 %v382
    %v393 = vpop.f32.mrf.mxu0
    %v394 = vadd.f32 0.0, %v393
    %v395 = vpop.f32.mrf.mxu0
    %v396 = vadd.f32 0.0, %v395
    %397 = vdwg.mxu0
    %398 = vmatpush.bf16.msra.mxu0 0
    %399 = vmatpush.bf16.msra.mxu0 0
    %400 = vmatpush.bf16.msra.mxu0 0
    %401 = vmatpush.bf16.msra.mxu0 0
    %402 = vmatpush.bf16.msra.mxu0 0
    %403 = vmatpush.bf16.msra.mxu0 0
    %404 = vmatpush.bf16.msra.mxu0 0
    %405 = vmatpush.bf16.msra.mxu0 %v362
    %406 = vmatmul.bf16.gmra.mxu0 %v382
    %v407 = vpop.f32.mrf.mxu0
    %v408 = vadd.f32 0.0, %v407
    %v409 = vpop.f32.mrf.mxu0
    %v410 = vadd.f32 0.0, %v409
    %411 = vdwg.mxu0
    %v412 = vmul.f32 %v394, %v408
    %v413 = vmul.f32 %v396, %v410
    %v414 = vadd.f32 %v412, %v413
    %v415 = vrot.slane %v414, 4
    %v416 = vadd.f32 %v414, %v415
    %v417 = vrot.slane %v416, 2
    %v418 = vadd.f32 %v416, %v417
    %v419 = vrot.slane %v418, 1
    %v420 = vadd.f32 %v418, %v419
    %421 = vst [vmem:[%s10] sm:$0x1] %v420
    // Predicated region
    $region58: #{model_forward.1} parent=1 // pred_check
      _
    $region59: #{model_forward.1} parent=1 // pred_check_branch
      %423 = sbr.rel (0) target = $region61
    $region60: #{model_forward.1} parent=1 // pred_region
      _
    $region61: #{model_forward.1} parent=1 // pred_fallthru
      _
    // Predicated region
    $region62: #{model_forward.1} parent=1 // pred_check
      _
    $region63: #{model_forward.1} parent=1 // pred_check_branch
      %425 = sbr.rel (0) target = $region65
    $region64: #{model_forward.1} parent=1 // pred_region
      _
    $region65: #{model_forward.1} parent=1 // pred_fallthru
      _
    %426 = vsyncpa [#allocation3], 1
    %427 = vsyncpa [#allocation5], 1
    %428 = vsyncpa [#allocation8], 1

</llo_original>
